<compile_context>
chip_gen: v6e
topology: v6e:2x2x1
jax: 0.10.0
libtpu: 0.0.40
codegen_flags: <defaults>
</compile_context>

<pallas_src>
from typing import NamedTuple

import jax
import jax.numpy as jnp
from jax.experimental import pallas as pl
from jax.experimental.pallas import tpu as pltpu


# --------------------------------------------------------------------------- #
# Small helpers
# --------------------------------------------------------------------------- #
def _round_up(x: int, m: int) -> int:
    return ((x + m - 1) // m) * m


def _device_kind() -> str:
    try:
        return jax.devices()[0].device_kind.lower()
    except Exception:
        return ""


def _is_v5() -> bool:
    return "v5" in _device_kind()


def _is_v7x() -> bool:
    return "v7" in _device_kind()


def _vmem_limit_bytes() -> int:
    """Generation-aware scoped-VMEM budget (75% of physical, capped)."""
    try:
        phys = int(pltpu.get_tpu_info().vmem_capacity_bytes)
    except Exception:
        phys = 64 * 1024 * 1024  # conservative: v7x has 64 MiB per TensorCore
    return min(phys * 3 // 4, 100 * 1024 * 1024)


_HAS_BUFFERED = hasattr(pl, "Buffered")


def _resident_spec(block_shape):
    """Grid-invariant operand: DMA'd once, stays resident in VMEM.

    Single-buffered (pl.Buffered(1)) when available so the default 2-deep
    pipelining doesn't double the resident-weight footprint.
    """
    if _HAS_BUFFERED:
        return pl.BlockSpec(block_shape, lambda i: (0, 0),
                            pipeline_mode=pl.Buffered(1))
    return pl.BlockSpec(block_shape, lambda i: (0, 0))


# --------------------------------------------------------------------------- #
# Parameters (padded / cast ONCE, outside the hot path)
# --------------------------------------------------------------------------- #
class QNetParams(NamedTuple):
    w1: jax.Array      # [in_p,  hid_p]  matmul dtype (bf16 by default)
    b1: jax.Array      # [1,     hid_p]  f32
    w2: jax.Array      # [hid_p, out_p]  matmul dtype
    b2: jax.Array      # [1,     out_p]  f32
    in_size: int
    hid_size: int
    out_size: int


def prepare_qnet_params(w1, b1, w2, b2, *, param_dtype=jnp.bfloat16):
    """One-time pad (lane-dense) + cast of QNet parameters.

    w1: [in, hid], b1: [hid], w2: [hid, out], b2: [out].
    Padding is zero-filled, so slicing the kernel output back to
    [:, :out_size] is exact.
    """
    in_size, hid_size = w1.shape
    out_size = w2.shape[1]

    # Feature-dim padding: 128 lanes always; 256-multiples for large dims on
    # v6e/v7x (2x256^2 MXU), keep 128 on v5e (4x128^2 MXU).
    big_mult = 128 if _is_v5() else 256
    in_p = _round_up(in_size, big_mult if in_size > 128 else 128)
    hid_p = _round_up(hid_size, big_mult if hid_size > 128 else 128)
    out_p = _round_up(out_size, 128)

    w1_p = jnp.pad(jnp.asarray(w1, param_dtype),
                   ((0, in_p - in_size), (0, hid_p - hid_size)))
    w2_p = jnp.pad(jnp.asarray(w2, param_dtype),
                   ((0, hid_p - hid_size), (0, out_p - out_size)))
    # Biases stay f32: added after f32 MXU accumulation (VPU f32 path works on
    # all generations, incl. v5e which has no bf16 VPU).
    b1_p = jnp.pad(jnp.asarray(b1, jnp.float32), (0, hid_p - hid_size)).reshape(1, hid_p)
    b2_p = jnp.pad(jnp.asarray(b2, jnp.float32), (0, out_p - out_size)).reshape(1, out_p)

    return QNetParams(w1_p, b1_p, w2_p, b2_p, in_size, hid_size, out_size)


# --------------------------------------------------------------------------- #
# Kernel
# --------------------------------------------------------------------------- #
def _qnet_kernel(x_ref, w1_ref, b1_ref, w2_ref, b2_ref, o_ref):
    # Layer 1: (TILE_B, IN) @ (IN, HID) on the MXU, f32 accumulation.
    h = jnp.dot(x_ref[...], w1_ref[...], preferred_element_type=jnp.float32)
    h = jnp.maximum(h + b1_ref[...], 0.0)                 # bias + ReLU (VPU, f32)
    # Layer 2: (TILE_B, HID) @ (HID, OUT) on the MXU, f32 accumulation.
    out = jnp.dot(h.astype(w2_ref.dtype), w2_ref[...],
                  preferred_element_type=jnp.float32)
    o_ref[...] = (out + b2_ref[...]).astype(o_ref.dtype)


def qnet_forward(x, params: QNetParams, *, tile_b=None):
    """Fused 2-layer MLP forward:  relu(x @ w1 + b1) @ w2 + b2.

    x: [B, in] (any float dtype).  Returns [B, out] float32.
    """
    B, in_size = x.shape
    if in_size != params.in_size:
        raise ValueError(f"x has {in_size} features, params expect {params.in_size}")

    in_p, hid_p = params.w1.shape
    out_p = params.w2.shape[1]
    mm_dtype = params.w1.dtype
    w_item = jnp.dtype(mm_dtype).itemsize

    # ---- batch tiling (sublane-aligned, generation-aware default) ----------
    if tile_b is None:
        tile_b = 128 if _is_v5() else 256          # v6e/v7x: amortize grid steps
    tile_b = max(8, _round_up(min(tile_b, _round_up(B, 8)), 8))
    if _is_v7x() and _round_up(B, 8) >= 16:
        # Keep >= 2 batch tiles so the "parallel" axis feeds both TensorCores.
        half = max(8, (_round_up(B, 8) // 2 // 8) * 8)
        tile_b = min(tile_b, half)
    b_p = _round_up(B, tile_b)
    grid_b = b_p // tile_b

    # ---- VMEM budgeting: assert resident weights + pipelined tiles fit -----
    w_bufs = 1 if _HAS_BUFFERED else 2             # single- vs double-buffered weights
    required = (w_bufs * ((in_p * hid_p + hid_p * out_p) * w_item
                          + (hid_p + out_p) * 4)
                + 2 * tile_b * in_p * w_item       # double-buffered x tile
                + 2 * tile_b * out_p * 4)          # double-buffered out tile
    vmem_limit = _vmem_limit_bytes()
    if required + (2 << 20) > vmem_limit:
        # TODO(synk): add a hid/out weight-tiling grid axis with an f32 VMEM
        # accumulator so W1/W2 need not be fully VMEM-resident at large sizes.
        raise ValueError(
            f"QNet weights too large to keep VMEM-resident: need ~{required >> 20} MiB "
            f"(+2 MiB headroom) but scoped VMEM budget is {vmem_limit >> 20} MiB.")

    # ---- x padding (fast path when already aligned), directly in mm dtype --
    if b_p == B and in_p == in_size and x.dtype == mm_dtype:
        x_p = x
    else:
        x_p = jnp.pad(x.astype(mm_dtype), ((0, b_p - B), (0, in_p - in_size)))

    cost = pl.CostEstimate(
        flops=2 * b_p * (in_p * hid_p + hid_p * out_p),
        transcendentals=0,
        bytes_accessed=(b_p * in_p * w_item                       # x (once)
                        + (in_p * hid_p + hid_p * out_p) * w_item  # weights (once)
                        + (hid_p + out_p) * 4                      # biases
                        + b_p * out_p * 4),                        # out
    )

    out_arr = pl.pallas_call(
        _qnet_kernel,
        out_shape=jax.ShapeDtypeStruct((b_p, out_p), jnp.float32),
        grid_spec=pl.GridSpec(
            grid=(grid_b,),
            in_specs=[
                # x: tiled over the batch grid -> double-buffered HBM->VMEM.
                pl.BlockSpec((tile_b, in_p), lambda i: (i, 0)),
                # Weights / biases: grid-invariant, VMEM-resident, single-buffered.
                _resident_spec((in_p, hid_p)),
                _resident_spec((1, hid_p)),
                _resident_spec((hid_p, out_p)),
                _resident_spec((1, out_p)),
            ],
            out_specs=pl.BlockSpec((tile_b, out_p), lambda i: (i, 0)),
        ),
        compiler_params=pltpu.CompilerParams(
            dimension_semantics=("parallel",),     # batch tiles independent
            vmem_limit_bytes=vmem_limit,
        ),
        cost_estimate=cost,
    )(x_p, params.w1, params.b1, params.w2, params.b2)

    # Strip batch / lane padding (padded rows/cols are exact zeros + bias).
    return out_arr[:B, :params.out_size]


# --------------------------------------------------------------------------- #
# Init (mimics nn.Linear default init, weights stored as [in, out])
# --------------------------------------------------------------------------- #
def init_qnet_params(key, input_size, hidden_size, output_size):
    k1, k2, k3, k4 = jax.random.split(key, 4)
    lim1 = 1.0 / jnp.sqrt(jnp.float32(input_size))
    lim2 = 1.0 / jnp.sqrt(jnp.float32(hidden_size))
    w1 = jax.random.uniform(k1, (input_size, hidden_size), jnp.float32, -lim1, lim1)
    b1 = jax.random.uniform(k2, (hidden_size,), jnp.float32, -lim1, lim1)
    w2 = jax.random.uniform(k3, (hidden_size, output_size), jnp.float32, -lim2, lim2)
    b2 = jax.random.uniform(k4, (output_size,), jnp.float32, -lim2, lim2)
    return w1, b1, w2, b2


if __name__ == "__main__":
    input_size, hidden_size, output_size = 16, 32, 4
    batch = 32

    key = jax.random.PRNGKey(0)
    kx, kp = jax.random.split(key)
    x = jax.random.normal(kx, (batch, input_size), jnp.float32)
    w1, b1, w2, b2 = init_qnet_params(kp, input_size, hidden_size, output_size)

    # Plain-JAX reference (same math as the PyTorch forward).
    ref = jnp.maximum(x @ w1 + b1, 0.0) @ w2 + b2

    # ---- exact f32 path (tight tolerance) ----------------------------------
    # tile_b=8 just to exercise a multi-step pipelined grid at this tiny batch.
    params_f32 = prepare_qnet_params(w1, b1, w2, b2, param_dtype=jnp.float32)
    fwd_f32 = jax.jit(lambda xx: qnet_forward(xx, params_f32, tile_b=8))
    out_f32 = fwd_f32(x)
    jax.block_until_ready(out_f32)
    assert out_f32.shape == (batch, output_size)
    assert jnp.allclose(out_f32, ref, atol=1e-5, rtol=1e-5)

    # ---- default bf16-matmul path (MXU-native; looser tolerance) -----------
    params_bf16 = prepare_qnet_params(w1, b1, w2, b2)   # bf16 weights, f32 acc
    fwd_bf16 = jax.jit(lambda xx: qnet_forward(xx, params_bf16, tile_b=16))
    out_bf16 = fwd_bf16(x)
    jax.block_until_ready(out_bf16)
    assert out_bf16.shape == (batch, output_size)
    assert jnp.allclose(out_bf16, ref, atol=3e-2, rtol=3e-2)

    print("KERNEL_OK")
</pallas_src>

<mosaic_0001>
module attributes {stable_mosaic.version = 11 : i64} {
  func.func @_qnet_kernel(%arg0: i32, %arg1: memref<8x128xf32, #tpu.memory_space<vmem>>, %arg2: memref<128x128xf32, #tpu.memory_space<vmem>>, %arg3: memref<1x128xf32, #tpu.memory_space<vmem>>, %arg4: memref<128x128xf32, #tpu.memory_space<vmem>>, %arg5: memref<1x128xf32, #tpu.memory_space<vmem>>, %arg6: memref<8x128xf32, #tpu.memory_space<vmem>>) attributes {dimension_semantics = [#tpu.dimension_semantics<parallel>], iteration_bounds = array<i64: 4>, scalar_prefetch = 0 : i64, scratch_operands = 0 : i64, tpu.core_type = #tpu.core_type<tc>, window_params = [{transform_indices = @transform_0, window_bounds = array<i64: 8, 128>}, {pipeline_mode = #tpu.pipeline_mode<synchronous>, transform_indices = @transform_1, window_bounds = array<i64: 128, 128>}, {pipeline_mode = #tpu.pipeline_mode<synchronous>, transform_indices = @transform_2, window_bounds = array<i64: 1, 128>}, {pipeline_mode = #tpu.pipeline_mode<synchronous>, transform_indices = @transform_3, window_bounds = array<i64: 128, 128>}, {pipeline_mode = #tpu.pipeline_mode<synchronous>, transform_indices = @transform_4, window_bounds = array<i64: 1, 128>}, {transform_indices = @transform_5, window_bounds = array<i64: 8, 128>}]} {
    %c0 = arith.constant 0 : index
    %c0_0 = arith.constant 0 : index
    %0 = vector.load %arg1[%c0, %c0_0] : memref<8x128xf32, #tpu.memory_space<vmem>>, vector<8x128xf32>
    %c0_1 = arith.constant 0 : index
    %c0_2 = arith.constant 0 : index
    %1 = vector.load %arg2[%c0_1, %c0_2] : memref<128x128xf32, #tpu.memory_space<vmem>>, vector<128x128xf32>
    %cst = arith.constant dense<0.000000e+00> : vector<8x128xf32>
    %2 = tpu.matmul %0, %1, %cst {dimension_numbers = #tpu.dot_dimension_numbers<[1], [0], [0], [1], [0, 0, 1, 1], [], []>} : vector<8x128xf32>, vector<128x128xf32>, vector<8x128xf32> -> vector<8x128xf32>
    %c0_3 = arith.constant 0 : index
    %c0_4 = arith.constant 0 : index
    %3 = vector.load %arg3[%c0_3, %c0_4] : memref<1x128xf32, #tpu.memory_space<vmem>>, vector<1x128xf32>
    %4 = vector.broadcast %3 : vector<1x128xf32> to vector<8x128xf32>
    %5 = arith.addf %2, %4 : vector<8x128xf32>
    %cst_5 = arith.constant 0.000000e+00 : f32
    %6 = vector.broadcast %cst_5 : f32 to vector<8x128xf32>
    %7 = arith.maximumf %5, %6 : vector<8x128xf32>
    %c0_6 = arith.constant 0 : index
    %c0_7 = arith.constant 0 : index
    %8 = vector.load %arg4[%c0_6, %c0_7] : memref<128x128xf32, #tpu.memory_space<vmem>>, vector<128x128xf32>
    %cst_8 = arith.constant dense<0.000000e+00> : vector<8x128xf32>
    %9 = tpu.matmul %7, %8, %cst_8 {dimension_numbers = #tpu.dot_dimension_numbers<[1], [0], [0], [1], [0, 0, 1, 1], [], []>} : vector<8x128xf32>, vector<128x128xf32>, vector<8x128xf32> -> vector<8x128xf32>
    %c0_9 = arith.constant 0 : index
    %c0_10 = arith.constant 0 : index
    %10 = vector.load %arg5[%c0_9, %c0_10] : memref<1x128xf32, #tpu.memory_space<vmem>>, vector<1x128xf32>
    %11 = vector.broadcast %10 : vector<1x128xf32> to vector<8x128xf32>
    %12 = arith.addf %9, %11 : vector<8x128xf32>
    %c0_11 = arith.constant 0 : index
    %c0_12 = arith.constant 0 : index
    %13 = vector.load %arg6[%c0_11, %c0_12] : memref<8x128xf32, #tpu.memory_space<vmem>>, vector<8x128xf32>
    tpu.vector_store %arg6[%c0_11, %c0_12], %12 {strides = array<i32>} : memref<8x128xf32, #tpu.memory_space<vmem>>, vector<8x128xf32>,
    return
  }
  func.func @transform_0(%arg0: i32) -> (i32, i32) {
    %c0_i32 = arith.constant 0 : i32
    %c0_i32_0 = arith.constant 0 : i32
    return %arg0, %c0_i32 : i32, i32
  }
  func.func @transform_1(%arg0: i32) -> (i32, i32) {
    %c0_i32 = arith.constant 0 : i32
    %c0_i32_0 = arith.constant 0 : i32
    %c0_i32_1 = arith.constant 0 : i32
    return %c0_i32, %c0_i32_0 : i32, i32
  }
  func.func @transform_2(%arg0: i32) -> (i32, i32) {
    %c0_i32 = arith.constant 0 : i32
    %c0_i32_0 = arith.constant 0 : i32
    %c0_i32_1 = arith.constant 0 : i32
    return %c0_i32, %c0_i32_0 : i32, i32
  }
  func.func @transform_3(%arg0: i32) -> (i32, i32) {
    %c0_i32 = arith.constant 0 : i32
    %c0_i32_0 = arith.constant 0 : i32
    %c0_i32_1 = arith.constant 0 : i32
    return %c0_i32, %c0_i32_0 : i32, i32
  }
  func.func @transform_4(%arg0: i32) -> (i32, i32) {
    %c0_i32 = arith.constant 0 : i32
    %c0_i32_0 = arith.constant 0 : i32
    %c0_i32_1 = arith.constant 0 : i32
    return %c0_i32, %c0_i32_0 : i32, i32
  }
  func.func @transform_5(%arg0: i32) -> (i32, i32) {
    %c0_i32 = arith.constant 0 : i32
    %c0_i32_0 = arith.constant 0 : i32
    return %arg0, %c0_i32 : i32, i32
  }
}

</mosaic_0001>

<llo_original>
// kernel: _lambda_.1
$region0: #{_lambda_.1}
  #allocation0 [shape = 'u32[]', space=smem, size = 0x4, offset = 0x4, fixed_abs, tag = 'smem constant byte address 0x4 - core index']
  #allocation1 [shape = 'u32[144,128]{1,0:T(1,128)}', space=vmem, size = 0x12000, scoped, tag = 'internal scratch']
  %s0 = inlined_call_operand.vmem [shape: f32[32,128], index: 0, kind: input, shape index: {}]
  %s1 = inlined_call_operand.hbm [shape: f32[128,128], index: 1, kind: input, shape index: {}]
  %s2 = inlined_call_operand.vmem [shape: f32[1,128], index: 2, kind: input, shape index: {}]
  %s3 = inlined_call_operand.hbm [shape: f32[128,128], index: 3, kind: input, shape index: {}]
  %s4 = inlined_call_operand.vmem [shape: f32[1,128], index: 4, kind: input, shape index: {}]
  %s5 = inlined_call_operand.vmem [shape: f32[32,128], index: 5, kind: output, shape index: {}]
  %s6 = sld [smem:[#allocation0]]
  $region61: #{_lambda_.1} parent=0
    _
  %s8 = ssub.s32 1, %s6
  %s9 = scalar_select 0, %s8, %s6
  $region1: #{_lambda_.1} parent=0
    #allocation2 [shape = 'u8[65536]{0}', space=vmem, size = 0x10000, scoped, tag = 'input window, operand 1, single buffered']
    #allocation3 [shape = 's32[2]{0}', space=sflag, size = 0x8, scoped, tag = 'scoped memory for _lambda_.1']
    #allocation4 [shape = 'u8[65536]{0}', space=vmem, size = 0x10000, scoped, tag = 'input window, operand 3, single buffered']
    #allocation5 [shape = 's32[1]{0}', space=sflag, size = 0x4, scoped, tag = 'scoped memory for _lambda_.1']
    %10 = vsyncpa [#allocation3], 0
    %11 = vsyncpa [#allocation5], 0
    loop: start=0, step=1, limit=6
    $region2: #{_lambda_.1} parent=1 // loop_pre_header
      _
    $region3: #{_lambda_.1} parent=1 // loop_header
      %s13 = sphi 0, %s17
      %p14 = scmp.ge.s32.totalorder %s13, 6
      %s23 = sphi 0, %s25
      %s26 = sphi 0, %s23
      %s27 = sphi 0, %s26
      %s43 = sphi 0, %s27
      %s47 = sphi 0, %s47
      %s49 = sphi 0, %s47
      %s50 = sphi 0, %s49
      %s64 = sphi 0, %s50
      %s68 = sphi 0, %s68
      %s70 = sphi 0, %s68
      %s71 = sphi 0, %s70
      %s85 = sphi 0, %s71
      %s89 = sphi 0, %s89
      %s91 = sphi 0, %s89
      %s92 = sphi 0, %s91
      %s106 = sphi 0, %s92
      %s110 = sphi 0, %s110
      %s112 = sphi 0, %s110
      %s113 = sphi 0, %s112
      %s127 = sphi 0, %s113
      %s133 = sphi 0, %s135
      %s136 = sphi 0, %s133
      %s137 = sphi 0, %s136
      %s153 = sphi 0, %s137
    $region4: #{_lambda_.1} parent=1 // loop_header_branch
      %16 = sbr.rel (%p14) target = $region8
    $region5: #{_lambda_.1} parent=1 // loop_body
      %s18 = ssub.s32 %s13, 1
      %s19 = ssub.s32 %s13, 2
      %s20 = sadd.s32 %s13, 1
      %s21 = ssub.s32 %s13, %s20
      %p22 = scmp.eq.s32.totalorder %s21, 0
      %s24 = sadd.s32 %s23, 1
      %s25 = scalar_select %p22, %s23, %s24
      %p28 = pneg %p22
      %p29 = scmp.eq.s32.totalorder %s13, 3
      %p30 = por %p28, %p29
      %p31 = scmp.ne.s32.totalorder %s23, %s26
      %p32 = scmp.eq.s32.totalorder %s13, 0
      %p33 = por %p31, %p32
      %p34 = scmp.ne.s32.totalorder %s23, %s26
      %p35 = scmp.eq.s32.totalorder %s18, 3
      %p36 = por %p34, %p35
      %p37 = scmp.ne.s32.totalorder %s26, %s27
      %p38 = scmp.eq.s32.totalorder %s18, 0
      %p39 = por %p37, %p38
      %p40 = scmp.ne.s32.totalorder %s26, %s27
      %p41 = scmp.eq.s32.totalorder %s19, 3
      %p42 = por %p40, %p41
      %p44 = scmp.ne.s32.totalorder %s27, %s43
      %p45 = scmp.eq.s32.totalorder %s19, 0
      %p46 = por %p44, %p45
      %s48 = sadd.s32 %s47, 1
      %p51 = scmp.eq.s32.totalorder %s13, 3
      %p52 = scmp.ne.s32.totalorder %s47, %s49
      %p53 = scmp.eq.s32.totalorder %s13, 0
      %p54 = por %p52, %p53
      %p55 = scmp.ne.s32.totalorder %s47, %s49
      %p56 = scmp.eq.s32.totalorder %s18, 3
      %p57 = por %p55, %p56
      %p58 = scmp.ne.s32.totalorder %s49, %s50
      %p59 = scmp.eq.s32.totalorder %s18, 0
      %p60 = por %p58, %p59
      %p61 = scmp.ne.s32.totalorder %s49, %s50
      %p62 = scmp.eq.s32.totalorder %s19, 3
      %p63 = por %p61, %p62
      %p65 = scmp.ne.s32.totalorder %s50, %s64
      %p66 = scmp.eq.s32.totalorder %s19, 0
      %p67 = por %p65, %p66
      %s69 = sadd.s32 %s68, 1
      %p72 = scmp.eq.s32.totalorder %s13, 3
      %p73 = scmp.ne.s32.totalorder %s68, %s70
      %p74 = scmp.eq.s32.totalorder %s13, 0
      %p75 = por %p73, %p74
      %p76 = scmp.ne.s32.totalorder %s68, %s70
      %p77 = scmp.eq.s32.totalorder %s18, 3
      %p78 = por %p76, %p77
      %p79 = scmp.ne.s32.totalorder %s70, %s71
      %p80 = scmp.eq.s32.totalorder %s18, 0
      %p81 = por %p79, %p80
      %p82 = scmp.ne.s32.totalorder %s70, %s71
      %p83 = scmp.eq.s32.totalorder %s19, 3
      %p84 = por %p82, %p83
      %p86 = scmp.ne.s32.totalorder %s71, %s85
      %p87 = scmp.eq.s32.totalorder %s19, 0
      %p88 = por %p86, %p87
      %s90 = sadd.s32 %s89, 1
      %p93 = scmp.eq.s32.totalorder %s13, 3
      %p94 = scmp.ne.s32.totalorder %s89, %s91
      %p95 = scmp.eq.s32.totalorder %s13, 0
      %p96 = por %p94, %p95
      %p97 = scmp.ne.s32.totalorder %s89, %s91
      %p98 = scmp.eq.s32.totalorder %s18, 3
      %p99 = por %p97, %p98
      %p100 = scmp.ne.s32.totalorder %s91, %s92
      %p101 = scmp.eq.s32.totalorder %s18, 0
      %p102 = por %p100, %p101
      %p103 = scmp.ne.s32.totalorder %s91, %s92
      %p104 = scmp.eq.s32.totalorder %s19, 3
      %p105 = por %p103, %p104
      %p107 = scmp.ne.s32.totalorder %s92, %s106
      %p108 = scmp.eq.s32.totalorder %s19, 0
      %p109 = por %p107, %p108
      %s111 = sadd.s32 %s110, 1
      %p114 = scmp.eq.s32.totalorder %s13, 3
      %p115 = scmp.ne.s32.totalorder %s110, %s112
      %p116 = scmp.eq.s32.totalorder %s13, 0
      %p117 = por %p115, %p116
      %p118 = scmp.ne.s32.totalorder %s110, %s112
      %p119 = scmp.eq.s32.totalorder %s18, 3
      %p120 = por %p118, %p119
      %p121 = scmp.ne.s32.totalorder %s112, %s113
      %p122 = scmp.eq.s32.totalorder %s18, 0
      %p123 = por %p121, %p122
      %p124 = scmp.ne.s32.totalorder %s112, %s113
      %p125 = scmp.eq.s32.totalorder %s19, 3
      %p126 = por %p124, %p125
      %p128 = scmp.ne.s32.totalorder %s113, %s127
      %p129 = scmp.eq.s32.totalorder %s19, 0
      %p130 = por %p128, %p129
      %s131 = ssub.s32 %s13, %s20
      %p132 = scmp.eq.s32.totalorder %s131, 0
      %s134 = sadd.s32 %s133, 1
      %s135 = scalar_select %p132, %s133, %s134
      %p138 = pneg %p132
      %p139 = scmp.eq.s32.totalorder %s13, 3
      %p140 = por %p138, %p139
      %p141 = scmp.ne.s32.totalorder %s133, %s136
      %p142 = scmp.eq.s32.totalorder %s13, 0
      %p143 = por %p141, %p142
      %p144 = scmp.ne.s32.totalorder %s133, %s136
      %p145 = scmp.eq.s32.totalorder %s18, 3
      %p146 = por %p144, %p145
      %p147 = scmp.ne.s32.totalorder %s136, %s137
      %p148 = scmp.eq.s32.totalorder %s18, 0
      %p149 = por %p147, %p148
      %p150 = scmp.ne.s32.totalorder %s136, %s137
      %p151 = scmp.eq.s32.totalorder %s19, 3
      %p152 = por %p150, %p151
      %p154 = scmp.ne.s32.totalorder %s137, %s153
      %p155 = scmp.eq.s32.totalorder %s19, 0
      %p156 = por %p154, %p155
      %p157 = scmp.le.s32.totalorder 1, %s13
      %p158 = scmp.lt.s32.totalorder %s13, 5
      %p159 = pnand %p157, %p158
      %p160 = pneg %p159
      // Predicated region
      $region9: #{_lambda_.1} parent=5 // pred_check
        _
      $region10: #{_lambda_.1} parent=5 // pred_check_branch
        %162 = sbr.rel (%p159) target = $region12
      $region11: #{_lambda_.1} parent=5 // pred_region
        %s163 = ssub.s32 %s13, 1
        // Predicated region
        $region13: #{_lambda_.1} parent=11 // pred_check
          %p164 = pneg %p60
        $region14: #{_lambda_.1} parent=11 // pred_check_branch
          %166 = sbr.rel (%p164) target = $region16
        $region15: #{_lambda_.1} parent=11 // pred_region
          %s168 = ssub.s32 2048, 2048
          %169 = vsyncadd [#allocation3], %s168
          %s170 = sshll.u32 [#allocation2], 4
          %s171 = int_to_ptr.vmem [resolvable:$true] %s170
          %176 = dma.hbm_to_vmem [thread:$0]  %s1, 2048, %s171, [#allocation3], 128, 128, 8
        $region16: #{_lambda_.1} parent=11 // pred_fallthru
          _
        // Predicated region
        $region17: #{_lambda_.1} parent=11 // pred_check
          %p177 = pneg %p81
        $region18: #{_lambda_.1} parent=11 // pred_check_branch
          %179 = sbr.rel (%p177) target = $region20
        $region19: #{_lambda_.1} parent=11 // pred_region
          _
        $region20: #{_lambda_.1} parent=11 // pred_fallthru
          _
        // Predicated region
        $region21: #{_lambda_.1} parent=11 // pred_check
          %p180 = pneg %p102
        $region22: #{_lambda_.1} parent=11 // pred_check_branch
          %182 = sbr.rel (%p180) target = $region24
        $region23: #{_lambda_.1} parent=11 // pred_region
          %s184 = ssub.s32 2048, 2048
          %185 = vsyncadd [#allocation5], %s184
          %s186 = sshll.u32 [#allocation4], 4
          %s187 = int_to_ptr.vmem [resolvable:$true] %s186
          %192 = dma.hbm_to_vmem [thread:$0]  %s3, 2048, %s187, [#allocation5], 128, 128, 8
        $region24: #{_lambda_.1} parent=11 // pred_fallthru
          _
        // Predicated region
        $region25: #{_lambda_.1} parent=11 // pred_check
          %p193 = pneg %p123
        $region26: #{_lambda_.1} parent=11 // pred_check_branch
          %195 = sbr.rel (%p193) target = $region28
        $region27: #{_lambda_.1} parent=11 // pred_region
          _
        $region28: #{_lambda_.1} parent=11 // pred_fallthru
          _
      $region12: #{_lambda_.1} parent=5 // pred_fallthru
        _
      %p196 = scmp.lt.s32.totalorder %s13, 4
      // Predicated region
      $region29: #{_lambda_.1} parent=5 // pred_check
        %p197 = pneg %p196
      $region30: #{_lambda_.1} parent=5 // pred_check_branch
        %199 = sbr.rel (%p197) target = $region32
      $region31: #{_lambda_.1} parent=5 // pred_region
        // Predicated region
        $region33: #{_lambda_.1} parent=31 // pred_check
          %p200 = pneg %p33
        $region34: #{_lambda_.1} parent=31 // pred_check_branch
          %202 = sbr.rel (%p200) target = $region36
        $region35: #{_lambda_.1} parent=31 // pred_region
          %p203 = scmp.lt.s32.totalorder %s13, 3
          %s204 = scalar_select %p203, %s13, 3
          %s205 = smul.addr %s204, 8
          %s206 = scalar_lea.vmem %s0, %s205
        $region36: #{_lambda_.1} parent=31 // pred_fallthru
          _
      $region32: #{_lambda_.1} parent=5 // pred_fallthru
        _
      %p207 = scmp.le.s32.totalorder 1, %s13
      %p208 = scmp.lt.s32.totalorder %s13, 5
      %p209 = pnand %p207, %p208
      %p210 = pneg %p209
      // Predicated region
      $region37: #{_lambda_.1} parent=5 // pred_check
        _
      $region38: #{_lambda_.1} parent=5 // pred_check_branch
        %212 = sbr.rel (%p209) target = $region40
      $region39: #{_lambda_.1} parent=5 // pred_region
        %s213 = ssub.s32 %s13, 1
        // Predicated region
        $region41: #{_lambda_.1} parent=39 // pred_check
          %p214 = pneg %p60
        $region42: #{_lambda_.1} parent=39 // pred_check_branch
          %216 = sbr.rel (%p214) target = $region44
        $region43: #{_lambda_.1} parent=39 // pred_region
          %217 = dma.done [#allocation3], 2048
        $region44: #{_lambda_.1} parent=39 // pred_fallthru
          _
        // Predicated region
        $region45: #{_lambda_.1} parent=39 // pred_check
          %p218 = pneg %p102
        $region46: #{_lambda_.1} parent=39 // pred_check_branch
          %220 = sbr.rel (%p218) target = $region48
        $region47: #{_lambda_.1} parent=39 // pred_region
          %221 = dma.done [#allocation5], 2048
        $region48: #{_lambda_.1} parent=39 // pred_fallthru
          _
        %p222 = scmp.lt.s32.totalorder %s18, 3
        %s223 = scalar_select %p222, %s18, 3
        %s224 = smul.addr %s223, 8
        %s225 = scalar_lea.vmem %s0, %s224
        %p226 = pneg %p39
        %p227 = pneg %p36
        %p228 = pneg %p60
        %p229 = pneg %p57
        %p230 = pneg %p81
        %p231 = pneg %p78
        %p232 = pneg %p102
        %p233 = pneg %p99
        %p234 = pneg %p123
        %p235 = pneg %p120
        %p236 = pneg %p149
        %p237 = pneg %p146
        %p238 = scmp.lt.s32.totalorder %s18, 3
        %s239 = scalar_select %p238, %s18, 3
        %s240 = smul.addr %s239, 8
        %s241 = scalar_lea.vmem %s5, %s240
        %p242 = scmp.lt.s32.totalorder %s18, 3
        %s243 = scalar_select %p242, %s18, 3
        %s244 = smul.addr %s243, 8
        %s245 = scalar_lea.vmem %s0, %s244
        %p246 = scmp.lt.s32.totalorder %s18, 3
        %s247 = scalar_select %p246, %s18, 3
        %s248 = smul.addr %s247, 8
        %s249 = scalar_lea.vmem %s5, %s248
        %v250 = vld [vmem:[%s245] sm:$0xff]
        %v251 = vld [vmem:[#allocation2] sm:$0xff]
        %v252 = vld [vmem:[#allocation2 + $0x8] sm:$0xff]
        %v253 = vld [vmem:[#allocation2 + $0x10] sm:$0xff]
        %v254 = vld [vmem:[#allocation2 + $0x18] sm:$0xff]
        %v255 = vld [vmem:[#allocation2 + $0x20] sm:$0xff]
        %v256 = vld [vmem:[#allocation2 + $0x28] sm:$0xff]
        %v257 = vld [vmem:[#allocation2 + $0x30] sm:$0xff]
        %v258 = vld [vmem:[#allocation2 + $0x38] sm:$0xff]
        %v259 = vld [vmem:[#allocation2 + $0x40] sm:$0xff]
        %v260 = vld [vmem:[#allocation2 + $0x48] sm:$0xff]
        %v261 = vld [vmem:[#allocation2 + $0x50] sm:$0xff]
        %v262 = vld [vmem:[#allocation2 + $0x58] sm:$0xff]
        %v263 = vld [vmem:[#allocation2 + $0x60] sm:$0xff]
        %v264 = vld [vmem:[#allocation2 + $0x68] sm:$0xff]
        %v265 = vld [vmem:[#allocation2 + $0x70] sm:$0xff]
        %v266 = vld [vmem:[#allocation2 + $0x78] sm:$0xff]
        %v267 = vld [vmem:[%s2] sm:$0x1]
        %v269 = vlaneseq
        %v270 = vshrl.u32 %v269, 7
        %v271 = vsub.s32 0, %v270
        %v272 = vrot.slane %v267, %v271
        %274 = vmatprep.subr.mxu0 0.0
        %275 = vmatpush1.msra.mxu0 %v266
        %276 = vmatprep.subr.mxu0 0.0
        %277 = vmatpush1.msra.mxu0 %v265
        %278 = vmatprep.subr.mxu0 0.0
        %279 = vmatpush1.msra.mxu0 %v264
        %280 = vmatprep.subr.mxu0 0.0
        %281 = vmatpush1.msra.mxu0 %v263
        %282 = vmatprep.subr.mxu0 0.0
        %283 = vmatpush1.msra.mxu0 %v262
        %284 = vmatprep.subr.mxu0 0.0
        %285 = vmatpush1.msra.mxu0 %v261
        %286 = vmatprep.subr.mxu0 0.0
        %287 = vmatpush1.msra.mxu0 %v260
        %288 = vmatprep.subr.mxu0 0.0
        %289 = vmatpush1.msra.mxu0 %v259
        %290 = vmatprep.subr.mxu0 0.0
        %291 = vmatpush1.msra.mxu0 %v258
        %292 = vmatprep.subr.mxu0 0.0
        %293 = vmatpush1.msra.mxu0 %v257
        %294 = vmatprep.subr.mxu0 0.0
        %295 = vmatpush1.msra.mxu0 %v256
        %296 = vmatprep.subr.mxu0 0.0
        %297 = vmatpush1.msra.mxu0 %v255
        %298 = vmatprep.subr.mxu0 0.0
        %299 = vmatpush1.msra.mxu0 %v254
        %300 = vmatprep.subr.mxu0 0.0
        %301 = vmatpush1.msra.mxu0 %v253
        %302 = vmatprep.subr.mxu0 0.0
        %303 = vmatpush1.msra.mxu0 %v252
        %304 = vmatprep.subr.mxu0 0.0
        %305 = vmatpush1.msra.mxu0 %v251
        %306 = vmatprep.subr.mxu0 0.0
        %307 = vmatpush2.msra.mxu0 0.0
        %308 = vmatprep.subr.mxu0 0.0
        %309 = vmatpush2.msra.mxu0 0.0
        %310 = vmatprep.subr.mxu0 0.0
        %311 = vmatpush2.msra.mxu0 0.0
        %312 = vmatprep.subr.mxu0 0.0
        %313 = vmatpush2.msra.mxu0 0.0
        %314 = vmatprep.subr.mxu0 0.0
        %315 = vmatpush2.msra.mxu0 0.0
        %316 = vmatprep.subr.mxu0 0.0
        %317 = vmatpush2.msra.mxu0 0.0
        %318 = vmatprep.subr.mxu0 0.0
        %319 = vmatpush2.msra.mxu0 0.0
        %320 = vmatprep.subr.mxu0 0.0
        %321 = vmatpush2.msra.mxu0 0.0
        %322 = vmatprep.subr.mxu0 0.0
        %323 = vmatpush2.msra.mxu0 0.0
        %324 = vmatprep.subr.mxu0 0.0
        %325 = vmatpush2.msra.mxu0 0.0
        %326 = vmatprep.subr.mxu0 0.0
        %327 = vmatpush2.msra.mxu0 0.0
        %328 = vmatprep.subr.mxu0 0.0
        %329 = vmatpush2.msra.mxu0 0.0
        %330 = vmatprep.subr.mxu0 0.0
        %331 = vmatpush2.msra.mxu0 0.0
        %332 = vmatprep.subr.mxu0 0.0
        %333 = vmatpush2.msra.mxu0 0.0
        %334 = vmatprep.subr.mxu0 0.0
        %335 = vmatpush2.msra.mxu0 0.0
        %336 = vmatprep.subr.mxu0 0.0
        %337 = vmatpush2.msra.mxu0 0.0
        %338 = vmatprep.mubr.f32.mxu0 0.0
        %339 = vmatmul.mubr.f32.gmra.mxu0 %v250
        %v340 = vpop.f32.mrf.mxu0
        %v341 = vadd.f32 %v272, %v340
        %v342 = vpop.f32.mrf.mxu0
        %343 = vdwg.mxu0
        %v344 = vmax.f32 %v341, 0.0
        %v345 = vld [vmem:[#allocation4] sm:$0xff]
        %v346 = vld [vmem:[#allocation4 + $0x8] sm:$0xff]
        %v347 = vld [vmem:[#allocation4 + $0x10] sm:$0xff]
        %v348 = vld [vmem:[#allocation4 + $0x18] sm:$0xff]
        %v349 = vld [vmem:[#allocation4 + $0x20] sm:$0xff]
        %v350 = vld [vmem:[#allocation4 + $0x28] sm:$0xff]
        %v351 = vld [vmem:[#allocation4 + $0x30] sm:$0xff]
        %v352 = vld [vmem:[#allocation4 + $0x38] sm:$0xff]
        %v353 = vld [vmem:[#allocation4 + $0x40] sm:$0xff]
        %v354 = vld [vmem:[#allocation4 + $0x48] sm:$0xff]
        %v355 = vld [vmem:[#allocation4 + $0x50] sm:$0xff]
        %v356 = vld [vmem:[#allocation4 + $0x58] sm:$0xff]
        %v357 = vld [vmem:[#allocation4 + $0x60] sm:$0xff]
        %v358 = vld [vmem:[#allocation4 + $0x68] sm:$0xff]
        %v359 = vld [vmem:[#allocation4 + $0x70] sm:$0xff]
        %v360 = vld [vmem:[#allocation4 + $0x78] sm:$0xff]
        %v361 = vld [vmem:[%s4] sm:$0x1]
        %v363 = vlaneseq
        %v364 = vshrl.u32 %v363, 7
        %v365 = vsub.s32 0, %v364
        %v366 = vrot.slane %v361, %v365
        %368 = vmatprep.subr.mxu0 0.0
        %369 = vmatpush1.msra.mxu0 %v360
        %370 = vmatprep.subr.mxu0 0.0
        %371 = vmatpush1.msra.mxu0 %v359
        %372 = vmatprep.subr.mxu0 0.0
        %373 = vmatpush1.msra.mxu0 %v358
        %374 = vmatprep.subr.mxu0 0.0
        %375 = vmatpush1.msra.mxu0 %v357
        %376 = vmatprep.subr.mxu0 0.0
        %377 = vmatpush1.msra.mxu0 %v356
        %378 = vmatprep.subr.mxu0 0.0
        %379 = vmatpush1.msra.mxu0 %v355
        %380 = vmatprep.subr.mxu0 0.0
        %381 = vmatpush1.msra.mxu0 %v354
        %382 = vmatprep.subr.mxu0 0.0
        %383 = vmatpush1.msra.mxu0 %v353
        %384 = vmatprep.subr.mxu0 0.0
        %385 = vmatpush1.msra.mxu0 %v352
        %386 = vmatprep.subr.mxu0 0.0
        %387 = vmatpush1.msra.mxu0 %v351
        %388 = vmatprep.subr.mxu0 0.0
        %389 = vmatpush1.msra.mxu0 %v350
        %390 = vmatprep.subr.mxu0 0.0
        %391 = vmatpush1.msra.mxu0 %v349
        %392 = vmatprep.subr.mxu0 0.0
        %393 = vmatpush1.msra.mxu0 %v348
        %394 = vmatprep.subr.mxu0 0.0
        %395 = vmatpush1.msra.mxu0 %v347
        %396 = vmatprep.subr.mxu0 0.0
        %397 = vmatpush1.msra.mxu0 %v346
        %398 = vmatprep.subr.mxu0 0.0
        %399 = vmatpush1.msra.mxu0 %v345
        %400 = vmatprep.subr.mxu0 0.0
        %401 = vmatpush2.msra.mxu0 0.0
        %402 = vmatprep.subr.mxu0 0.0
        %403 = vmatpush2.msra.mxu0 0.0
        %404 = vmatprep.subr.mxu0 0.0
        %405 = vmatpush2.msra.mxu0 0.0
        %406 = vmatprep.subr.mxu0 0.0
        %407 = vmatpush2.msra.mxu0 0.0
        %408 = vmatprep.subr.mxu0 0.0
        %409 = vmatpush2.msra.mxu0 0.0
        %410 = vmatprep.subr.mxu0 0.0
        %411 = vmatpush2.msra.mxu0 0.0
        %412 = vmatprep.subr.mxu0 0.0
        %413 = vmatpush2.msra.mxu0 0.0
        %414 = vmatprep.subr.mxu0 0.0
        %415 = vmatpush2.msra.mxu0 0.0
        %416 = vmatprep.subr.mxu0 0.0
        %417 = vmatpush2.msra.mxu0 0.0
        %418 = vmatprep.subr.mxu0 0.0
        %419 = vmatpush2.msra.mxu0 0.0
        %420 = vmatprep.subr.mxu0 0.0
        %421 = vmatpush2.msra.mxu0 0.0
        %422 = vmatprep.subr.mxu0 0.0
        %423 = vmatpush2.msra.mxu0 0.0
        %424 = vmatprep.subr.mxu0 0.0
        %425 = vmatpush2.msra.mxu0 0.0
        %426 = vmatprep.subr.mxu0 0.0
        %427 = vmatpush2.msra.mxu0 0.0
        %428 = vmatprep.subr.mxu0 0.0
        %429 = vmatpush2.msra.mxu0 0.0
        %430 = vmatprep.subr.mxu0 0.0
        %431 = vmatpush2.msra.mxu0 0.0
        %432 = vmatprep.mubr.f32.mxu0 0.0
        %433 = vmatmul.mubr.f32.gmra.mxu0 %v344
        %v434 = vpop.f32.mrf.mxu0
        %v435 = vadd.f32 %v366, %v434
        %v436 = vpop.f32.mrf.mxu0
        %437 = vdwg.mxu0
        %438 = vst [vmem:[%s249] sm:$0xff] %v435
        %p439 = scmp.lt.s32.totalorder %s18, 3
        %s440 = scalar_select %p439, %s18, 3
        %s441 = smul.addr %s440, 8
        %s442 = scalar_lea.vmem %s5, %s441
        // Predicated region
        $region49: #{_lambda_.1} parent=39 // pred_check
          %p443 = pneg %p146
        $region50: #{_lambda_.1} parent=39 // pred_check_branch
          %445 = sbr.rel (%p443) target = $region52
        $region51: #{_lambda_.1} parent=39 // pred_region
          _
        $region52: #{_lambda_.1} parent=39 // pred_fallthru
          _
      $region40: #{_lambda_.1} parent=5 // pred_fallthru
        _
      %p446 = scmp.le.s32.totalorder 2, %s13
      // Predicated region
      $region53: #{_lambda_.1} parent=5 // pred_check
        %p447 = pneg %p446
      $region54: #{_lambda_.1} parent=5 // pred_check_branch
        %449 = sbr.rel (%p447) target = $region56
      $region55: #{_lambda_.1} parent=5 // pred_region
        %s450 = ssub.s32 %s13, 2
        // Predicated region
        $region57: #{_lambda_.1} parent=55 // pred_check
          %p451 = pneg %p152
        $region58: #{_lambda_.1} parent=55 // pred_check_branch
          %453 = sbr.rel (%p451) target = $region60
        $region59: #{_lambda_.1} parent=55 // pred_region
          %p454 = scmp.lt.s32.totalorder %s19, 3
          %s455 = scalar_select %p454, %s19, 3
          %s456 = smul.addr %s455, 8
          %s457 = scalar_lea.vmem %s5, %s456
        $region60: #{_lambda_.1} parent=55 // pred_fallthru
          _
      $region56: #{_lambda_.1} parent=5 // pred_fallthru
        _
    $region6: #{_lambda_.1} parent=1 // loop_footer
      %s17 = sadd.s32 1, %s13
    $region7: #{_lambda_.1} parent=1 // loop_footer_branch
      %12 = sbr.rel target = $region3
    $region8: #{_lambda_.1} parent=1 // loop_exit
      _
    %458 = vsyncpa [#allocation3], 1
    %s459 = scalar_lea.sflag [#allocation3], 1
    %460 = vsyncpa %s459, 1
    %461 = vsyncpa [#allocation5], 1

</llo_original>
